<compile_context>
chip_gen: v7x
topology: tpu7x:2x2x1
jax: 0.10.0
libtpu: 0.0.40
codegen_flags: <defaults>
</compile_context>

<pallas_src>
import functools
import math

import jax
import jax.numpy as jnp
from jax.experimental import pallas as pl
from jax.experimental.pallas import tpu as pltpu


def _rel_diff_kernel(p_ref, t_ref, out_ref, *, n_rows, f_total, tile_f, need_mask):
    c = pl.program_id(0)          # TensorCore split of feature tiles
    k = pl.program_id(1)          # feature-tile index within this core's share

    @pl.when(k == 0)
    def _():
        out_ref[...] = jnp.zeros_like(out_ref)

    # Inputs stream HBM->VMEM in their native dtype; upcast per tile on the VPU.
    d = p_ref[...].astype(jnp.float32) - t_ref[...].astype(jnp.float32)   # (n, tf)

    # Per feature f: sum_{i<j} (d_if - d_jf)^2 == n * sum_i (d_if - mean_i d_if)^2.
    # The `n` factor and the 1/(C(n,2)*F) normalization are applied once in the
    # wrapper, not per grid step.
    mean_d = jnp.sum(d, axis=0, keepdims=True) * jnp.float32(1.0 / n_rows)
    dc = d - mean_d
    contrib = jnp.sum(dc * dc, axis=0, keepdims=True)                     # (1, tf)

    if need_mask:
        # Mask on the (1, tf) per-feature partial, not on the (n, tf) tile.
        # Exact because every op above is lane-independent: garbage lanes of the
        # ragged last tile only corrupt their own lane, which is zeroed here.
        # Also zeroes whole overflow tiles (flat tile index clamped in index_map).
        flat_tile = c * pl.num_programs(1) + k
        feat = flat_tile * tile_f + jax.lax.broadcasted_iota(
            jnp.int32, contrib.shape, 1)
        contrib = jnp.where(feat < f_total, contrib, jnp.float32(0.0))

    # Scalar accumulate into this core's resident (1,1,128) output block
    # (all lanes carry the same running total; wrapper reads lane 0).
    out_ref[...] += jnp.sum(contrib)


def _rows_rounded(n_rows, dtype):
    """Rows rounded up to the sublane packing of this dtype (f32:8, bf16:16, i8:32)."""
    itemsize = jnp.dtype(dtype).itemsize
    sub = max(8, 32 // max(1, itemsize))
    return ((n_rows + sub - 1) // sub) * sub


def relative_difference_loss(predictions, targets, *, tile_f=None):
    """Pallas equivalent of RelativeDifferenceLoss.forward (scalar f32 output)."""
    assert predictions.shape == targets.shape, "predictions/targets shape mismatch"
    n = predictions.shape[0]
    f = int(math.prod(predictions.shape[1:]))

    if n < 2:
        # torch.mean over zero pairs -> nan; keep the same semantics.
        return jnp.float32(jnp.nan)

    # Native dtype straight into the kernel: no astype / pad HBM round-trips.
    p = predictions.reshape(n, f)
    t = targets.reshape(n, f)

    # ---- per-generation VMEM budget -> feature tile width -------------------
    try:
        vmem_cap = int(pltpu.get_tpu_info().vmem_capacity_bytes)
    except Exception:
        vmem_cap = 64 * 1024 * 1024  # conservative fallback (v7x per-core VMEM)
    budget = min(int(vmem_cap * 0.4), 40 * 1024 * 1024)

    # VMEM bytes per 128-lane column of one feature tile:
    #   2x double-buffered native-dtype input tiles (pred + tgt)
    # + 2 full-width f32 temporaries (d and centered d) Mosaic may materialize.
    # (The tiny (1,1,128) per-core output block is ignored.)
    bytes_per_col = 2 * 128 * (
        _rows_rounded(n, p.dtype) * jnp.dtype(p.dtype).itemsize
        + _rows_rounded(n, t.dtype) * jnp.dtype(t.dtype).itemsize
    ) + 2 * 128 * _rows_rounded(n, jnp.float32) * 4
    max_cols = max(1, budget // bytes_per_col)

    f_lanes = ((f + 127) // 128) * 128
    tf = min(f_lanes, max_cols * 128)
    if tile_f is not None:
        tf = min(tf, max(128, (int(tile_f) // 128) * 128))
    if tf >= f:
        tf = f  # single full-width tile (lane dim equals the full array dim)
    num_tiles = pl.cdiv(f, tf)
    # TODO(synk): for very large batch N (tf forced below ~1024 lanes), add an
    # N-chunk reduction grid axis with per-feature count/sum/M2 accumulators
    # (Chan parallel-variance merge) so the tile footprint is independent of N.

    # Split feature tiles across TensorCores: 2-way on v7x megacore; on
    # single-TC v5e/v6e the extra grid axis is just a cheap sequential pass.
    num_cores = 2 if num_tiles >= 2 else 1
    num_k = pl.cdiv(num_tiles, num_cores)
    # Mask needed for a ragged last tile and/or a clamped overflow tile.
    need_mask = (f % tf != 0) or (num_cores * num_k != num_tiles)

    def in_map(c, k):
        # Clamp so a possible overflow tile (odd num_tiles) re-reads a valid
        # tile; its contribution is zeroed by the in-kernel feature mask.
        return (0, jnp.minimum(c * num_k + k, num_tiles - 1))

    n_pairs = n * (n - 1) // 2
    inv_denom = float(n) / (float(n_pairs) * float(f))  # == 2 / ((n-1) * F)

    vmem_limit = int(min(
        int(vmem_cap * 0.85),
        max(32 << 20, pl.cdiv(tf, 128) * bytes_per_col + (16 << 20)),
    ))

    kernel = functools.partial(
        _rel_diff_kernel,
        n_rows=n, f_total=f, tile_f=tf, need_mask=need_mask)

    out = pl.pallas_call(
        kernel,
        out_shape=jax.ShapeDtypeStruct((num_cores, 1, 128), jnp.float32),
        grid_spec=pltpu.PrefetchScalarGridSpec(
            num_scalar_prefetch=0,
            grid=(num_cores, num_k),
            in_specs=[
                pl.BlockSpec((n, tf), in_map),
                pl.BlockSpec((n, tf), in_map),
            ],
            out_specs=pl.BlockSpec((1, 1, 128), lambda c, k: (c, 0, 0)),
        ),
        compiler_params=pltpu.CompilerParams(
            dimension_semantics=("parallel", "arbitrary"),
            vmem_limit_bytes=vmem_limit,
        ),
    )(p, t)

    # Sum the per-core partials and apply the folded normalization once.
    return (jnp.sum(out[:, 0, 0]) * jnp.float32(inv_denom)).astype(jnp.float32)


def _reference_loss(predictions, targets):
    """Pure-JAX reference mirroring the PyTorch pairwise formulation."""
    n = predictions.shape[0]
    p = predictions.reshape(n, -1).astype(jnp.float32)
    t = targets.reshape(n, -1).astype(jnp.float32)
    ii, jj = jnp.triu_indices(n, k=1)
    diff_pred = p[ii] - p[jj]
    diff_gt = t[ii] - t[jj]
    return jnp.mean((diff_pred - diff_gt) ** 2)


if __name__ == "__main__":
    key = jax.random.PRNGKey(0)
    k1, k2, k3, k4, k5, k6 = jax.random.split(key, 6)

    # 1) f32, NCHW = (4, 4, 16, 16): lane-aligned feature axis, single tile.
    p1 = jax.random.normal(k1, (4, 4, 16, 16), dtype=jnp.float32)
    t1 = jax.random.normal(k2, (4, 4, 16, 16), dtype=jnp.float32)
    loss1 = jax.block_until_ready(relative_difference_loss(p1, t1))
    ref1 = _reference_loss(p1, t1)
    assert jnp.allclose(loss1, ref1, rtol=1e-4, atol=1e-6), (loss1, ref1)

    # 2) bf16 inputs consumed natively (no wrapper upcast copy).
    p2 = jax.random.normal(k3, (4, 4, 16, 16), dtype=jnp.bfloat16)
    t2 = jax.random.normal(k4, (4, 4, 16, 16), dtype=jnp.bfloat16)
    loss2 = jax.block_until_ready(relative_difference_loss(p2, t2))
    ref2 = _reference_loss(p2, t2)
    assert jnp.allclose(loss2, ref2, rtol=1e-3, atol=1e-5), (loss2, ref2)

    # 3) ragged feature axis (F = 315) with a forced 128-wide tile: exercises the
    #    2-core split, the clamped overflow tile, and the partial-level mask.
    p3 = jax.random.normal(k5, (3, 5, 7, 9), dtype=jnp.float32)
    t3 = jax.random.normal(k6, (3, 5, 7, 9), dtype=jnp.float32)
    loss3 = jax.block_until_ready(relative_difference_loss(p3, t3, tile_f=128))
    ref3 = _reference_loss(p3, t3)
    assert jnp.allclose(loss3, ref3, rtol=1e-4, atol=1e-6), (loss3, ref3)

    # 4) even multi-tile split (4 tiles over 2 cores), mask disabled.
    loss4 = jax.block_until_ready(relative_difference_loss(p1, t1, tile_f=256))
    assert jnp.allclose(loss4, ref1, rtol=1e-4, atol=1e-6), (loss4, ref1)

    print("KERNEL_OK")
</pallas_src>

<mosaic_0001>
module attributes {stable_mosaic.version = 11 : i64} {
  func.func @_rel_diff_kernel(%arg0: i32, %arg1: i32, %arg2: memref<4x1024xf32, #tpu.memory_space<vmem>>, %arg3: memref<4x1024xf32, #tpu.memory_space<vmem>>, %arg4: memref<1x1x128xf32, #tpu.memory_space<vmem>>) attributes {dimension_semantics = [#tpu.dimension_semantics<parallel>, #tpu.dimension_semantics<arbitrary>], iteration_bounds = array<i64: 1, 1>, scalar_prefetch = 0 : i64, scratch_operands = 0 : i64, tpu.core_type = #tpu.core_type<tc>, window_params = [{transform_indices = @transform_0, window_bounds = array<i64: 4, 1024>}, {transform_indices = @transform_1, window_bounds = array<i64: 4, 1024>}, {transform_indices = @transform_2, window_bounds = array<i64: 1, 1, 128>}]} {
    %c0_i32 = arith.constant 0 : i32
    %0 = arith.cmpi eq, %arg1, %c0_i32 : i32
    %1 = arith.extui %0 : i1 to i32
    %c0_i32_0 = arith.constant 0 : i32
    %2 = arith.cmpi ne, %1, %c0_i32_0 : i32
    scf.if %2 {
      %cst_13 = arith.constant 0.000000e+00 : f32
      %23 = vector.broadcast %cst_13 : f32 to vector<1x1x128xf32>
      %c0_14 = arith.constant 0 : index
      %c0_15 = arith.constant 0 : index
      %c0_16 = arith.constant 0 : index
      %24 = vector.load %arg4[%c0_14, %c0_15, %c0_16] : memref<1x1x128xf32, #tpu.memory_space<vmem>>, vector<1x1x128xf32>
      tpu.vector_store %arg4[%c0_14, %c0_15, %c0_16], %23 {strides = array<i32>} : memref<1x1x128xf32, #tpu.memory_space<vmem>>, vector<1x1x128xf32>,
    } else {
    }
    %c0 = arith.constant 0 : index
    %c0_1 = arith.constant 0 : index
    %3 = vector.load %arg2[%c0, %c0_1] : memref<4x1024xf32, #tpu.memory_space<vmem>>, vector<4x1024xf32>
    %c0_2 = arith.constant 0 : index
    %c0_3 = arith.constant 0 : index
    %4 = vector.load %arg3[%c0_2, %c0_3] : memref<4x1024xf32, #tpu.memory_space<vmem>>, vector<4x1024xf32>
    %5 = arith.subf %3, %4 : vector<4x1024xf32>
    %cst = arith.constant dense<0.000000e+00> : vector<1024xf32>
    %6 = vector.multi_reduction <add>, %5, %cst [0] : vector<4x1024xf32> to vector<1024xf32>
    %7 = vector.shape_cast %6 : vector<1024xf32> to vector<1x1024xf32>
    %cst_4 = arith.constant 2.500000e-01 : f32
    %8 = vector.broadcast %cst_4 : f32 to vector<1x1024xf32>
    %9 = arith.mulf %7, %8 : vector<1x1024xf32>
    %10 = vector.broadcast %9 : vector<1x1024xf32> to vector<4x1024xf32>
    %11 = arith.subf %5, %10 : vector<4x1024xf32>
    %12 = arith.mulf %11, %11 : vector<4x1024xf32>
    %cst_5 = arith.constant dense<0.000000e+00> : vector<1024xf32>
    %13 = vector.multi_reduction <add>, %12, %cst_5 [0] : vector<4x1024xf32> to vector<1024xf32>
    %14 = vector.shape_cast %13 : vector<1024xf32> to vector<1x1024xf32>
    %c0_6 = arith.constant 0 : index
    %c0_7 = arith.constant 0 : index
    %c0_8 = arith.constant 0 : index
    %15 = vector.load %arg4[%c0_6, %c0_7, %c0_8] : memref<1x1x128xf32, #tpu.memory_space<vmem>>, vector<1x1x128xf32>
    %16 = vector.shape_cast %14 : vector<1x1024xf32> to vector<1x1x1024xf32>
    %cst_9 = arith.constant dense<0.000000e+00> : vector<1xf32>
    %17 = vector.multi_reduction <add>, %16, %cst_9 [1, 2] : vector<1x1x1024xf32> to vector<1xf32>
    %18 = vector.shape_cast %17 : vector<1xf32> to vector<1x1x1xf32>
    %19 = vector.extract %18[0, 0, 0] : f32 from vector<1x1x1xf32>
    %20 = vector.broadcast %19 : f32 to vector<1x1x128xf32>
    %21 = arith.addf %15, %20 : vector<1x1x128xf32>
    %c0_10 = arith.constant 0 : index
    %c0_11 = arith.constant 0 : index
    %c0_12 = arith.constant 0 : index
    %22 = vector.load %arg4[%c0_10, %c0_11, %c0_12] : memref<1x1x128xf32, #tpu.memory_space<vmem>>, vector<1x1x128xf32>
    tpu.vector_store %arg4[%c0_10, %c0_11, %c0_12], %21 {strides = array<i32>} : memref<1x1x128xf32, #tpu.memory_space<vmem>>, vector<1x1x128xf32>,
    return
  }
  func.func @transform_0(%arg0: i32, %arg1: i32) -> (i32, i32) {
    %c1_i32 = arith.constant 1 : i32
    %0 = arith.muli %arg0, %c1_i32 : i32
    %1 = arith.addi %0, %arg1 : i32
    %c0_i32 = arith.constant 0 : i32
    %2 = arith.minsi %1, %c0_i32 : i32
    %c0_i32_0 = arith.constant 0 : i32
    %c0_i32_1 = arith.constant 0 : i32
    return %c0_i32_0, %2 : i32, i32
  }
  func.func @transform_1(%arg0: i32, %arg1: i32) -> (i32, i32) {
    %c1_i32 = arith.constant 1 : i32
    %0 = arith.muli %arg0, %c1_i32 : i32
    %1 = arith.addi %0, %arg1 : i32
    %c0_i32 = arith.constant 0 : i32
    %2 = arith.minsi %1, %c0_i32 : i32
    %c0_i32_0 = arith.constant 0 : i32
    %c0_i32_1 = arith.constant 0 : i32
    return %c0_i32_0, %2 : i32, i32
  }
  func.func @transform_2(%arg0: i32, %arg1: i32) -> (i32, i32, i32) {
    %c0_i32 = arith.constant 0 : i32
    %c0_i32_0 = arith.constant 0 : i32
    %c0_i32_1 = arith.constant 0 : i32
    return %arg0, %c0_i32, %c0_i32_0 : i32, i32, i32
  }
}

</mosaic_0001>

<llo_original>
// kernel: tpu_custom_call.1
$region0: #{tpu_custom_call.1}
  #allocation0 [shape = 'u32[]', space=smem, size = 0x4, offset = 0x4, fixed_abs, tag = 'smem constant byte address 0x4 - core index']
  #allocation1 [shape = 'u32[144,128]{1,0:T(1,128)}', space=vmem, size = 0x12000, scoped, tag = 'internal scratch']
  %s0 = inlined_call_operand.hbm [shape: f32[4,1024], index: 0, kind: input, shape index: {}]
  %s1 = inlined_call_operand.hbm [shape: f32[4,1024], index: 1, kind: input, shape index: {}]
  %s2 = inlined_call_operand.hbm [shape: f32[1,1,128], index: 2, kind: output, shape index: {}]
  %s3 = sld [smem:[#allocation0]]
  $region30: #{tpu_custom_call.1} parent=0
    _
  %s5 = ssub.s32 1, %s3
  %s6 = scalar_select 0, %s5, %s3
  $region1: #{tpu_custom_call.1} parent=0
    #allocation2 [shape = 'u8[16384]{0}', space=vmem, size = 0x4000, scoped, tag = 'input window, operand 0, single buffered']
    #allocation3 [shape = 's32[1]{0}', space=sflag, size = 0x4, scoped, tag = 'scoped memory for tpu_custom_call.1']
    #allocation4 [shape = 's32[1]{0}', space=sflag, size = 0x4, scoped, tag = 'scoped memory for tpu_custom_call.1']
    #allocation5 [shape = 'u8[16384]{0}', space=vmem, size = 0x4000, scoped, tag = 'input window, operand 1, single buffered']
    #allocation6 [shape = 's32[1]{0}', space=sflag, size = 0x4, scoped, tag = 'scoped memory for tpu_custom_call.1']
    #allocation7 [shape = 'u8[512]{0}', space=vmem, size = 0x400, scoped, tag = 'output window, operand 0, single buffered']
    %7 = vsyncpa [#allocation3], 0
    %8 = vsyncpa [#allocation6], 0
    %9 = vsyncpa [#allocation4], 0
    // Predicated region
    $region2: #{tpu_custom_call.1} parent=1 // pred_check
      _
    $region3: #{tpu_custom_call.1} parent=1 // pred_check_branch
      %11 = sbr.rel (0) target = $region5
    $region4: #{tpu_custom_call.1} parent=1 // pred_region
      %s12 = sadd.s32 0, 0
      %p13 = scmp.lt.s32.totalorder %s12, 0
      %s14 = scalar_select %p13, %s12, 0
      %s15 = smul.u32 8, %s14
      %s17 = ssub.s32 512, 512
      %18 = vsyncadd [#allocation3], %s17
      %s19 = smul.addr %s15, 64
      %s20 = scalar_lea.hbm %s0, %s19
      %s22 = sshll.u32 [#allocation2], 4
      %s23 = int_to_ptr.vmem [resolvable:$true] %s22
      %25 = dma.hbm_to_vmem [thread:$0]  %s20, 512, %s23, [#allocation3]
    $region5: #{tpu_custom_call.1} parent=1 // pred_fallthru
      _
    // Predicated region
    $region6: #{tpu_custom_call.1} parent=1 // pred_check
      _
    $region7: #{tpu_custom_call.1} parent=1 // pred_check_branch
      %27 = sbr.rel (0) target = $region9
    $region8: #{tpu_custom_call.1} parent=1 // pred_region
      %s28 = sadd.s32 0, 0
      %p29 = scmp.lt.s32.totalorder %s28, 0
      %s30 = scalar_select %p29, %s28, 0
      %s31 = smul.u32 8, %s30
      %s33 = ssub.s32 512, 512
      %34 = vsyncadd [#allocation6], %s33
      %s35 = smul.addr %s31, 64
      %s36 = scalar_lea.hbm %s1, %s35
      %s38 = sshll.u32 [#allocation5], 4
      %s39 = int_to_ptr.vmem [resolvable:$true] %s38
      %41 = dma.hbm_to_vmem [thread:$0]  %s36, 512, %s39, [#allocation6]
    $region9: #{tpu_custom_call.1} parent=1 // pred_fallthru
      _
    // Predicated region
    $region10: #{tpu_custom_call.1} parent=1 // pred_check
      _
    $region11: #{tpu_custom_call.1} parent=1 // pred_check_branch
      %43 = sbr.rel (0) target = $region13
    $region12: #{tpu_custom_call.1} parent=1 // pred_region
      %44 = dma.done [#allocation3], 512
    $region13: #{tpu_custom_call.1} parent=1 // pred_fallthru
      _
    // Predicated region
    $region14: #{tpu_custom_call.1} parent=1 // pred_check
      _
    $region15: #{tpu_custom_call.1} parent=1 // pred_check_branch
      %46 = sbr.rel (0) target = $region17
    $region16: #{tpu_custom_call.1} parent=1 // pred_region
      %47 = dma.done [#allocation6], 512
    $region17: #{tpu_custom_call.1} parent=1 // pred_fallthru
      _
    %s48 = sadd.s32 0, 0
    %p49 = scmp.lt.s32.totalorder %s48, 0
    %s50 = scalar_select %p49, %s48, 0
    %s51 = smul.u32 8, %s50
    %s52 = sadd.s32 0, 0
    %p53 = scmp.lt.s32.totalorder %s52, 0
    %s54 = scalar_select %p53, %s52, 0
    %s55 = smul.u32 8, %s54
    %p56 = scmp.eq.s32.totalorder 0, 0
    // Predicated region
    $region18: #{tpu_custom_call.1} parent=1 // pred_check
      %p57 = pneg %p56
    $region19: #{tpu_custom_call.1} parent=1 // pred_check_branch
      %59 = sbr.rel (%p57) target = $region21
    $region20: #{tpu_custom_call.1} parent=1 // pred_region
      %60 = vst [vmem:[#allocation7] sm:$0x1] 0.0
    $region21: #{tpu_custom_call.1} parent=1 // pred_fallthru
      _
    %v61 = vld [vmem:[#allocation2] sm:$0xff]
    %v62 = vld [vmem:[#allocation2 + $0x8] sm:$0xff]
    %v63 = vld [vmem:[#allocation2 + $0x10] sm:$0xff]
    %v64 = vld [vmem:[#allocation2 + $0x18] sm:$0xff]
    %v65 = vld [vmem:[#allocation5] sm:$0xff]
    %v66 = vld [vmem:[#allocation5 + $0x8] sm:$0xff]
    %v67 = vld [vmem:[#allocation5 + $0x10] sm:$0xff]
    %v68 = vld [vmem:[#allocation5 + $0x18] sm:$0xff]
    %v69 = vsub.f32 %v61, %v65
    %v70 = vsub.f32 %v62, %v66
    %v71 = vsub.f32 %v63, %v67
    %v72 = vsub.f32 %v64, %v68
    %v77 = vcombine.high %v69, %v69
    %v78 = vcombine.high %v70, %v70
    %v79 = vcombine.high %v71, %v71
    %v80 = vcombine.high %v72, %v72
    %vm85 = vcmask 1043456
    %v86 = vsel %vm85, %v69, 0.0
    %v87 = vrot.slane %v86, 4
    %v88 = vadd.f32 %v86, %v87
    %v89 = vrot.slane %v88, 2
    %v90 = vadd.f32 %v88, %v89
    %v91 = vrot.slane %v90, 1
    %v92 = vadd.f32 %v90, %v91
    %v93 = vsel %vm85, %v77, 0.0
    %v94 = vrot.slane %v93, 4
    %v95 = vadd.f32 %v93, %v94
    %v96 = vrot.slane %v95, 2
    %v97 = vadd.f32 %v95, %v96
    %v98 = vrot.slane %v97, 1
    %v99 = vadd.f32 %v97, %v98
    %v100 = vsel %vm85, %v70, 0.0
    %v101 = vrot.slane %v100, 4
    %v102 = vadd.f32 %v100, %v101
    %v103 = vrot.slane %v102, 2
    %v104 = vadd.f32 %v102, %v103
    %v105 = vrot.slane %v104, 1
    %v106 = vadd.f32 %v104, %v105
    %v107 = vsel %vm85, %v78, 0.0
    %v108 = vrot.slane %v107, 4
    %v109 = vadd.f32 %v107, %v108
    %v110 = vrot.slane %v109, 2
    %v111 = vadd.f32 %v109, %v110
    %v112 = vrot.slane %v111, 1
    %v113 = vadd.f32 %v111, %v112
    %v114 = vsel %vm85, %v71, 0.0
    %v115 = vrot.slane %v114, 4
    %v116 = vadd.f32 %v114, %v115
    %v117 = vrot.slane %v116, 2
    %v118 = vadd.f32 %v116, %v117
    %v119 = vrot.slane %v118, 1
    %v120 = vadd.f32 %v118, %v119
    %v121 = vsel %vm85, %v79, 0.0
    %v122 = vrot.slane %v121, 4
    %v123 = vadd.f32 %v121, %v122
    %v124 = vrot.slane %v123, 2
    %v125 = vadd.f32 %v123, %v124
    %v126 = vrot.slane %v125, 1
    %v127 = vadd.f32 %v125, %v126
    %v128 = vsel %vm85, %v72, 0.0
    %v129 = vrot.slane %v128, 4
    %v130 = vadd.f32 %v128, %v129
    %v131 = vrot.slane %v130, 2
    %v132 = vadd.f32 %v130, %v131
    %v133 = vrot.slane %v132, 1
    %v134 = vadd.f32 %v132, %v133
    %v135 = vsel %vm85, %v80, 0.0
    %v136 = vrot.slane %v135, 4
    %v137 = vadd.f32 %v135, %v136
    %v138 = vrot.slane %v137, 2
    %v139 = vadd.f32 %v137, %v138
    %v140 = vrot.slane %v139, 1
    %v141 = vadd.f32 %v139, %v140
    %v142 = vmul.f32 %v92, 0.25
    %v143 = vmul.f32 %v99, 0.25
    %v144 = vmul.f32 %v106, 0.25
    %v145 = vmul.f32 %v113, 0.25
    %v146 = vmul.f32 %v120, 0.25
    %v147 = vmul.f32 %v127, 0.25
    %v148 = vmul.f32 %v134, 0.25
    %v149 = vmul.f32 %v141, 0.25
    %v158 = vcombine.low %v142, %v143
    %v159 = vcombine.low %v144, %v145
    %v160 = vcombine.low %v146, %v147
    %v161 = vcombine.low %v148, %v149
    %v166 = vsub.f32 %v69, %v158
    %v167 = vsub.f32 %v70, %v159
    %v168 = vsub.f32 %v71, %v160
    %v169 = vsub.f32 %v72, %v161
    %v170 = vmul.f32 %v166, %v166
    %v171 = vmul.f32 %v167, %v167
    %v172 = vmul.f32 %v168, %v168
    %v173 = vmul.f32 %v169, %v169
    %v178 = vcombine.high %v170, %v170
    %v179 = vcombine.high %v171, %v171
    %v180 = vcombine.high %v172, %v172
    %v181 = vcombine.high %v173, %v173
    %v186 = vsel %vm85, %v170, 0.0
    %v187 = vrot.slane %v186, 4
    %v188 = vadd.f32 %v186, %v187
    %v189 = vrot.slane %v188, 2
    %v190 = vadd.f32 %v188, %v189
    %v191 = vrot.slane %v190, 1
    %v192 = vadd.f32 %v190, %v191
    %v193 = vsel %vm85, %v178, 0.0
    %v194 = vrot.slane %v193, 4
    %v195 = vadd.f32 %v193, %v194
    %v196 = vrot.slane %v195, 2
    %v197 = vadd.f32 %v195, %v196
    %v198 = vrot.slane %v197, 1
    %v199 = vadd.f32 %v197, %v198
    %v200 = vsel %vm85, %v171, 0.0
    %v201 = vrot.slane %v200, 4
    %v202 = vadd.f32 %v200, %v201
    %v203 = vrot.slane %v202, 2
    %v204 = vadd.f32 %v202, %v203
    %v205 = vrot.slane %v204, 1
    %v206 = vadd.f32 %v204, %v205
    %v207 = vsel %vm85, %v179, 0.0
    %v208 = vrot.slane %v207, 4
    %v209 = vadd.f32 %v207, %v208
    %v210 = vrot.slane %v209, 2
    %v211 = vadd.f32 %v209, %v210
    %v212 = vrot.slane %v211, 1
    %v213 = vadd.f32 %v211, %v212
    %v214 = vsel %vm85, %v172, 0.0
    %v215 = vrot.slane %v214, 4
    %v216 = vadd.f32 %v214, %v215
    %v217 = vrot.slane %v216, 2
    %v218 = vadd.f32 %v216, %v217
    %v219 = vrot.slane %v218, 1
    %v220 = vadd.f32 %v218, %v219
    %v221 = vsel %vm85, %v180, 0.0
    %v222 = vrot.slane %v221, 4
    %v223 = vadd.f32 %v221, %v222
    %v224 = vrot.slane %v223, 2
    %v225 = vadd.f32 %v223, %v224
    %v226 = vrot.slane %v225, 1
    %v227 = vadd.f32 %v225, %v226
    %v228 = vsel %vm85, %v173, 0.0
    %v229 = vrot.slane %v228, 4
    %v230 = vadd.f32 %v228, %v229
    %v231 = vrot.slane %v230, 2
    %v232 = vadd.f32 %v230, %v231
    %v233 = vrot.slane %v232, 1
    %v234 = vadd.f32 %v232, %v233
    %v235 = vsel %vm85, %v181, 0.0
    %v236 = vrot.slane %v235, 4
    %v237 = vadd.f32 %v235, %v236
    %v238 = vrot.slane %v237, 2
    %v239 = vadd.f32 %v237, %v238
    %v240 = vrot.slane %v239, 1
    %v241 = vadd.f32 %v239, %v240
    %v242 = vld [vmem:[#allocation7] sm:$0x1]
    %vm243 = vcmask 1040384
    %v244 = vsel %vm243, %v192, 0.0
    %v245 = vsel %vm243, %v199, 0.0
    %v246 = vadd.f32 %v244, %v245
    %v247 = vsel %vm243, %v206, 0.0
    %v248 = vadd.f32 %v246, %v247
    %v249 = vsel %vm243, %v213, 0.0
    %v250 = vadd.f32 %v248, %v249
    %v251 = vsel %vm243, %v220, 0.0
    %v252 = vadd.f32 %v250, %v251
    %v253 = vsel %vm243, %v227, 0.0
    %v254 = vadd.f32 %v252, %v253
    %v255 = vsel %vm243, %v234, 0.0
    %v256 = vadd.f32 %v254, %v255
    %v257 = vsel %vm243, %v241, 0.0
    %v258 = vadd.f32 %v256, %v257
    %259 = vadd.xlane.f32.xlu0 %v258
    %v260 = vpop.xlane.xlu0 %259
    %v261 = vrot.slane %v260, 4
    %v262 = vadd.f32 %v260, %v261
    %v263 = vrot.slane %v262, 2
    %v264 = vadd.f32 %v262, %v263
    %v265 = vrot.slane %v264, 1
    %v266 = vadd.f32 %v264, %v265
    %s267 = vtos %v266
    %v268 = vstv %s267
    %v269 = vadd.f32 %v242, %v268
    %270 = vst [vmem:[#allocation7] sm:$0x1] %v269
    // Predicated region
    $region22: #{tpu_custom_call.1} parent=1 // pred_check
      _
    $region23: #{tpu_custom_call.1} parent=1 // pred_check_branch
      %272 = sbr.rel (0) target = $region25
    $region24: #{tpu_custom_call.1} parent=1 // pred_region
      %s274 = ssub.s32 16, 16
      %275 = vsyncadd [#allocation4], %s274
      %s277 = sshll.u32 [#allocation7], 4
      %s278 = int_to_ptr.vmem [resolvable:$true] %s277
      %280 = dma.vmem_to_hbm [thread:$0]  %s278, 16, %s2, [#allocation4]
    $region25: #{tpu_custom_call.1} parent=1 // pred_fallthru
      _
    // Predicated region
    $region26: #{tpu_custom_call.1} parent=1 // pred_check
      _
    $region27: #{tpu_custom_call.1} parent=1 // pred_check_branch
      %282 = sbr.rel (0) target = $region29
    $region28: #{tpu_custom_call.1} parent=1 // pred_region
      %283 = dma.done [#allocation4], 16
    $region29: #{tpu_custom_call.1} parent=1 // pred_fallthru
      _
    %284 = vsyncpa [#allocation3], 1
    %285 = vsyncpa [#allocation6], 1
    %286 = vsyncpa [#allocation4], 1

</llo_original>
